<compile_context>
chip_gen: v7x
topology: tpu7x:2x2x1
jax: 0.10.0
libtpu: 0.0.40
codegen_flags: <defaults>
</compile_context>

<pallas_src>
import math

import jax
import jax.numpy as jnp
from jax.experimental import pallas as pl
from jax.experimental.pallas import tpu as pltpu

_LN_EPS = 1e-5  # torch.nn.LayerNorm default


# ---------------------------------------------------------------------------
# Fused kernel: pixel-shuffle assembly -> LayerNorm -> Linear -> GELU -> Linear
# grid = (token_tiles, H1_tiles);  H1 axis is an "arbitrary" reduction axis.
# ---------------------------------------------------------------------------
def _projector_kernel(x0_ref, x1_ref, w1_ref, b1_ref, w2_ref, b2_ref, o_ref,
                      xn_ref, acc_ref):
    j = pl.program_id(1)
    tm, k = xn_ref.shape

    @pl.when(j == 0)
    def _():
        # Assemble the (TM, 4c) pixel-shuffled token tile from the two strided
        # half-blocks (the strided gather itself was done by the input DMAs),
        # LayerNorm it ONCE per token tile, cache the bf16 result for every H1 step.
        x0 = x0_ref[...].astype(jnp.float32).reshape(tm, k // 2)   # (TM, 2c)
        x1 = x1_ref[...].astype(jnp.float32).reshape(tm, k // 2)   # (TM, 2c)
        x = jnp.concatenate([x0, x1], axis=-1)                     # (TM, 4c)
        mu = jnp.mean(x, axis=-1, keepdims=True)
        var = jnp.mean(jnp.square(x - mu), axis=-1, keepdims=True)
        # gamma / beta are folded into w1 / b1 offline.
        xn_ref[...] = ((x - mu) * jax.lax.rsqrt(var + _LN_EPS)).astype(xn_ref.dtype)
        acc_ref[...] = jnp.zeros_like(acc_ref)

    # Linear1 tile on the MXU (bf16 x bf16 -> f32 accumulation) + bias + GELU.
    h = jnp.dot(xn_ref[...], w1_ref[...], preferred_element_type=jnp.float32)
    h = h + b1_ref[...]
    # TODO(synk): torch.nn.GELU defaults to exact erf; tanh approximation used here
    # (EUP-friendly), ~1e-3 level difference.
    h = jax.nn.gelu(h, approximate=True)

    # Linear2 partial sum over this H1 tile (GELU is elementwise over H1, so tiling
    # H1 and summing partial products is exact).
    acc_ref[...] += jnp.dot(h.astype(w2_ref.dtype), w2_ref[...],
                            preferred_element_type=jnp.float32)

    @pl.when(j == pl.num_programs(1) - 1)
    def _():
        o_ref[...] = (acc_ref[...] + b2_ref[...]).astype(o_ref.dtype)


def _fused_projector(x5, w1, b1, w2, b2, *, tn=512, out_dtype=jnp.bfloat16):
    """x5: (n, H, 2, W, 2c) bf16 layout view of the CLS-dropped ViT features.

    Returns (n*H*W, H2) = mlp(pixel_shuffle(x)) flattened over (image, token)."""
    n, H, two, W, twoc = x5.shape
    assert two == 2
    K = 2 * twoc                       # 4c projector input width
    TM = H * W                         # tokens per image == tokens per grid step
    k_w1, H1 = w1.shape
    H1_w2, H2 = w2.shape
    assert k_w1 == K and H1_w2 == H1, (w1.shape, w2.shape, K)
    assert TM % 8 == 0, "tokens per image must be sublane (8) aligned"

    tn = min(tn, H1)
    assert H1 % tn == 0, (H1, tn)
    nj = H1 // tn

    T = n * TM
    cost = pl.CostEstimate(
        flops=2 * T * K * H1 + 2 * T * H1 * H2,
        transcendentals=T * H1,                                   # tanh in GELU
        bytes_accessed=2 * (T * K + K * H1 + H1 * H2 + T * H2) + 4 * (H1 + H2),
    )

    grid_spec = pltpu.PrefetchScalarGridSpec(
        num_scalar_prefetch=0,
        grid=(n, nj),
        in_specs=[
            # Two strided half-blocks of one image: delta_w = 0 and delta_w = 1.
            # Each gives (H, W, 2c) = the [2i+dw, 2j] and [2i+dw, 2j+1] feature pairs.
            pl.BlockSpec((None, H, None, W, twoc), lambda i, j: (i, 0, 0, 0, 0)),
            pl.BlockSpec((None, H, None, W, twoc), lambda i, j: (i, 0, 1, 0, 0)),
            pl.BlockSpec((K, tn), lambda i, j: (0, j)),     # w1 tile  (bf16)
            pl.BlockSpec((1, tn), lambda i, j: (0, j)),     # b1 tile  (f32)
            pl.BlockSpec((tn, H2), lambda i, j: (j, 0)),    # w2 tile  (bf16)
            pl.BlockSpec((1, H2), lambda i, j: (0, 0)),     # b2       (f32)
        ],
        out_specs=pl.BlockSpec((TM, H2), lambda i, j: (i, 0)),
        scratch_shapes=[
            pltpu.VMEM((TM, K), jnp.bfloat16),    # cached LayerNorm output
            pltpu.VMEM((TM, H2), jnp.float32),    # Linear2 accumulator
        ],
    )

    return pl.pallas_call(
        _projector_kernel,
        out_shape=jax.ShapeDtypeStruct((n * TM, H2), out_dtype),
        grid_spec=grid_spec,
        compiler_params=pltpu.CompilerParams(
            dimension_semantics=("parallel", "arbitrary"),   # token tiles sharded on v7x
            vmem_limit_bytes=64 * 1024 * 1024,
        ),
        cost_estimate=cost,
    )(x5, x5, w1, b1, w2, b2)


# ---------------------------------------------------------------------------
# Module forward (everything downstream of the InternViT backbone)
# ---------------------------------------------------------------------------
def vision_transformer_forward(last_hidden_state, params, *,
                               downsample_ratio=0.5, tn=512):
    """last_hidden_state: (n, h*w+1, c) ViT output -> (n*h*w*ds^2, HIDDEN_SIZE)."""
    assert downsample_ratio == 0.5, "kernel is specialised for the module's 0.5 ratio"
    x = last_hidden_state[:, 1:, :]                          # drop CLS token
    n, l, c = x.shape
    hw = int(round(math.sqrt(l)))
    assert hw * hw == l, "non-square patch grid"
    assert hw % 2 == 0
    H = W = hw // 2

    # Free, transpose-less layout view: (n, H, 2, W, 2c).  Element [i, dw, j, :] is
    # the concat of rows (2i+dw, 2j) and (2i+dw, 2j+1) of the (hw, hw, c) grid, so the
    # kernel only needs to lane-concat the dw=0 / dw=1 blocks to get the 4c features.
    x5 = x.astype(jnp.bfloat16).reshape(n, H, 2, W, 2 * c)

    gamma = params["ln_gamma"].astype(jnp.float32)
    beta = params["ln_beta"].astype(jnp.float32)
    w1 = params["w1"].astype(jnp.float32)
    b1 = params["b1"].astype(jnp.float32)
    assert w1.shape[0] == 4 * c, (w1.shape, c)
    # Fold LayerNorm affine into Linear1 (free at runtime):
    #   ((x-mu)*rsqrt*gamma + beta) @ w1 + b1 == (x-mu)*rsqrt @ (gamma[:,None]*w1) + (beta@w1 + b1)
    w1f = (gamma[:, None] * w1).astype(jnp.bfloat16)
    b1f = (beta @ w1 + b1).reshape(1, -1).astype(jnp.float32)
    w2 = params["w2"].astype(jnp.bfloat16)
    b2 = params["b2"].astype(jnp.float32).reshape(1, -1)

    return _fused_projector(x5, w1f, b1f, w2, b2, tn=tn)     # (-1, HIDDEN_SIZE)


# ---------------------------------------------------------------------------
# Pure-JAX reference (faithful f32 mirror of the PyTorch module, tanh-GELU)
# ---------------------------------------------------------------------------
def _pixel_shuffle(x, scale_factor=0.5):
    n, w, h, c = x.shape
    x = x.reshape(n, w, int(h * scale_factor), int(c / scale_factor))
    x = jnp.transpose(x, (0, 2, 1, 3))
    x = x.reshape(n, int(h * scale_factor), int(w * scale_factor),
                  int(c / (scale_factor * scale_factor)))
    x = jnp.transpose(x, (0, 2, 1, 3))
    return x


def _reference_forward(last_hidden_state, params, *, downsample_ratio=0.5):
    x = last_hidden_state.astype(jnp.float32)[:, 1:, :]
    n, l, c = x.shape
    hw = int(round(math.sqrt(l)))
    assert hw * hw == l
    x = x.reshape(n, hw, hw, c)
    x = _pixel_shuffle(x, scale_factor=downsample_ratio)
    x = x.reshape(n, -1, x.shape[-1])

    mu = x.mean(-1, keepdims=True)
    var = ((x - mu) ** 2).mean(-1, keepdims=True)
    xn = (x - mu) * jax.lax.rsqrt(var + _LN_EPS) * params["ln_gamma"] + params["ln_beta"]
    h = jax.nn.gelu(xn @ params["w1"] + params["b1"], approximate=True)
    out = h @ params["w2"] + params["b2"]
    return out.reshape(-1, params["w2"].shape[-1])


if __name__ == "__main__":
    # Small deterministic shapes consistent with the module:
    #   batch=2, ViT patch grid 16x16 (+CLS -> seq 257), ViT hidden 64,
    #   downsample_ratio=0.5 -> 64 tokens/image with 256 features, HIDDEN_SIZE=128.
    batch = 2
    grid_hw = 16
    vit_hidden = 64
    llm_hidden = 128                                      # HIDDEN_SIZE
    downsample_ratio = 0.5
    proj_in = int(vit_hidden / (downsample_ratio ** 2))   # 256

    key = jax.random.PRNGKey(0)
    ks = jax.random.split(key, 7)

    # Synthetic ViT backbone output (see TODO at top of file).
    last_hidden_state = jax.random.normal(
        ks[0], (batch, grid_hw * grid_hw + 1, vit_hidden), dtype=jnp.float32)

    # Synthetic mlp1 projector weights (LayerNorm + Linear + GELU + Linear).
    # Linear weights are stored [in, out] (x @ W), i.e. torch weight transposed.
    params = {
        "ln_gamma": 1.0 + 0.1 * jax.random.normal(ks[1], (proj_in,), jnp.float32),
        "ln_beta": 0.1 * jax.random.normal(ks[2], (proj_in,), jnp.float32),
        "w1": jax.random.normal(ks[3], (proj_in, llm_hidden), jnp.float32)
              / math.sqrt(proj_in),
        "b1": 0.1 * jax.random.normal(ks[4], (llm_hidden,), jnp.float32),
        "w2": jax.random.normal(ks[5], (llm_hidden, llm_hidden), jnp.float32)
              / math.sqrt(llm_hidden),
        "b2": 0.1 * jax.random.normal(ks[6], (llm_hidden,), jnp.float32),
    }

    out = vision_transformer_forward(last_hidden_state, params,
                                     downsample_ratio=downsample_ratio)
    out = jax.block_until_ready(out)

    n_tok = batch * (grid_hw // 2) * (grid_hw // 2)
    assert out.shape == (n_tok, llm_hidden), out.shape
    assert out.dtype == jnp.bfloat16, out.dtype

    ref = _reference_forward(last_hidden_state, params,
                             downsample_ratio=downsample_ratio)
    out_f32 = out.astype(jnp.float32)
    max_err = float(jnp.max(jnp.abs(out_f32 - ref)))
    # Tolerance covers bf16 storage of tokens/weights/output (structural bugs are O(1)).
    assert bool(jnp.allclose(out_f32, ref, atol=6e-2, rtol=6e-2)), \
        f"max abs err {max_err}"

    print("KERNEL_OK")
</pallas_src>

<mosaic_0001>
module attributes {stable_mosaic.version = 11 : i64} {
  func.func @_projector_kernel(%arg0: i32, %arg1: i32, %arg2: memref<1x8x1x8x128xbf16, #tpu.memory_space<vmem>>, %arg3: memref<1x8x1x8x128xbf16, #tpu.memory_space<vmem>>, %arg4: memref<256x128xbf16, #tpu.memory_space<vmem>>, %arg5: memref<1x128xf32, #tpu.memory_space<vmem>>, %arg6: memref<128x128xbf16, #tpu.memory_space<vmem>>, %arg7: memref<1x128xf32, #tpu.memory_space<vmem>>, %arg8: memref<64x128xbf16, #tpu.memory_space<vmem>>, %arg9: memref<64x256xbf16, #tpu.memory_space<vmem>>, %arg10: memref<64x128xf32, #tpu.memory_space<vmem>>) attributes {dimension_semantics = [#tpu.dimension_semantics<parallel>, #tpu.dimension_semantics<arbitrary>], iteration_bounds = array<i64: 2, 1>, scalar_prefetch = 0 : i64, scratch_operands = 2 : i64, tpu.core_type = #tpu.core_type<tc>, window_params = [{transform_indices = @transform_0, window_bounds = array<i64: 1, 8, 1, 8, 128>}, {transform_indices = @transform_1, window_bounds = array<i64: 1, 8, 1, 8, 128>}, {transform_indices = @transform_2, window_bounds = array<i64: 256, 128>}, {transform_indices = @transform_3, window_bounds = array<i64: 1, 128>}, {transform_indices = @transform_4, window_bounds = array<i64: 128, 128>}, {pipeline_mode = #tpu.pipeline_mode<synchronous>, transform_indices = @transform_5, window_bounds = array<i64: 1, 128>}, {transform_indices = @transform_6, window_bounds = array<i64: 64, 128>}]} {
    %c0_i32 = arith.constant 0 : i32
    %0 = arith.cmpi eq, %arg1, %c0_i32 : i32
    %1 = arith.extui %0 : i1 to i32
    %c0_i32_0 = arith.constant 0 : i32
    %2 = arith.cmpi ne, %1, %c0_i32_0 : i32
    scf.if %2 {
      %c0_19 = arith.constant 0 : index
      %c0_20 = arith.constant 0 : index
      %c0_21 = arith.constant 0 : index
      %c0_22 = arith.constant 0 : index
      %c0_23 = arith.constant 0 : index
      %31 = vector.load %arg2[%c0_19, %c0_20, %c0_21, %c0_22, %c0_23] : memref<1x8x1x8x128xbf16, #tpu.memory_space<vmem>>, vector<1x8x1x8x128xbf16>
      %32 = vector.shape_cast %31 : vector<1x8x1x8x128xbf16> to vector<8x8x128xbf16>
      %33 = arith.extf %32 : vector<8x8x128xbf16> to vector<8x8x128xf32>
      %34 = vector.shape_cast %33 : vector<8x8x128xf32> to vector<64x128xf32>
      %c0_24 = arith.constant 0 : index
      %c0_25 = arith.constant 0 : index
      %c0_26 = arith.constant 0 : index
      %c0_27 = arith.constant 0 : index
      %c0_28 = arith.constant 0 : index
      %35 = vector.load %arg3[%c0_24, %c0_25, %c0_26, %c0_27, %c0_28] : memref<1x8x1x8x128xbf16, #tpu.memory_space<vmem>>, vector<1x8x1x8x128xbf16>
      %36 = vector.shape_cast %35 : vector<1x8x1x8x128xbf16> to vector<8x8x128xbf16>
      %37 = arith.extf %36 : vector<8x8x128xbf16> to vector<8x8x128xf32>
      %38 = vector.shape_cast %37 : vector<8x8x128xf32> to vector<64x128xf32>
      %39 = tpu.concatenate %34, %38 in 1 : vector<64x128xf32>, vector<64x128xf32> -> vector<64x256xf32>
      %cst_29 = arith.constant dense<0.000000e+00> : vector<64xf32>
      %40 = vector.multi_reduction <add>, %39, %cst_29 [1] : vector<64x256xf32> to vector<64xf32>
      %41 = vector.shape_cast %40 : vector<64xf32> to vector<64x1xf32>
      %cst_30 = arith.constant 2.560000e+02 : f32
      %42 = vector.broadcast %cst_30 : f32 to vector<64x1xf32>
      %43 = arith.divf %41, %42 : vector<64x1xf32>
      %44 = vector.broadcast %43 : vector<64x1xf32> to vector<64x256xf32>
      %45 = arith.subf %39, %44 : vector<64x256xf32>
      %46 = arith.mulf %45, %45 : vector<64x256xf32>
      %cst_31 = arith.constant dense<0.000000e+00> : vector<64xf32>
      %47 = vector.multi_reduction <add>, %46, %cst_31 [1] : vector<64x256xf32> to vector<64xf32>
      %48 = vector.shape_cast %47 : vector<64xf32> to vector<64x1xf32>
      %cst_32 = arith.constant 2.560000e+02 : f32
      %49 = vector.broadcast %cst_32 : f32 to vector<64x1xf32>
      %50 = arith.divf %48, %49 : vector<64x1xf32>
      %51 = vector.broadcast %43 : vector<64x1xf32> to vector<64x256xf32>
      %52 = arith.subf %39, %51 : vector<64x256xf32>
      %cst_33 = arith.constant 9.99999974E-6 : f32
      %53 = vector.broadcast %cst_33 : f32 to vector<64x1xf32>
      %54 = arith.addf %50, %53 : vector<64x1xf32>
      %55 = math.rsqrt %54 : vector<64x1xf32>
      %56 = vector.broadcast %55 : vector<64x1xf32> to vector<64x256xf32>
      %57 = arith.mulf %52, %56 : vector<64x256xf32>
      %58 = arith.truncf %57 : vector<64x256xf32> to vector<64x256xbf16>
      %c0_34 = arith.constant 0 : index
      %c0_35 = arith.constant 0 : index
      %59 = vector.load %arg9[%c0_34, %c0_35] : memref<64x256xbf16, #tpu.memory_space<vmem>>, vector<64x256xbf16>
      tpu.vector_store %arg9[%c0_34, %c0_35], %58 {strides = array<i32>} : memref<64x256xbf16, #tpu.memory_space<vmem>>, vector<64x256xbf16>,
      %cst_36 = arith.constant 0.000000e+00 : f32
      %60 = vector.broadcast %cst_36 : f32 to vector<64x128xf32>
      %c0_37 = arith.constant 0 : index
      %c0_38 = arith.constant 0 : index
      %61 = vector.load %arg10[%c0_37, %c0_38] : memref<64x128xf32, #tpu.memory_space<vmem>>, vector<64x128xf32>
      tpu.vector_store %arg10[%c0_37, %c0_38], %60 {strides = array<i32>} : memref<64x128xf32, #tpu.memory_space<vmem>>, vector<64x128xf32>,
    } else {
    }
    %c0 = arith.constant 0 : index
    %c0_1 = arith.constant 0 : index
    %3 = vector.load %arg9[%c0, %c0_1] : memref<64x256xbf16, #tpu.memory_space<vmem>>, vector<64x256xbf16>
    %c0_2 = arith.constant 0 : index
    %c0_3 = arith.constant 0 : index
    %4 = vector.load %arg4[%c0_2, %c0_3] : memref<256x128xbf16, #tpu.memory_space<vmem>>, vector<256x128xbf16>
    %cst = arith.constant dense<0.000000e+00> : vector<64x128xf32>
    %5 = tpu.matmul %3, %4, %cst {dimension_numbers = #tpu.dot_dimension_numbers<[1], [0], [0], [1], [0, 0, 1, 1], [], []>} : vector<64x256xbf16>, vector<256x128xbf16>, vector<64x128xf32> -> vector<64x128xf32>
    %c0_4 = arith.constant 0 : index
    %c0_5 = arith.constant 0 : index
    %6 = vector.load %arg5[%c0_4, %c0_5] : memref<1x128xf32, #tpu.memory_space<vmem>>, vector<1x128xf32>
    %7 = vector.broadcast %6 : vector<1x128xf32> to vector<64x128xf32>
    %8 = arith.addf %5, %7 : vector<64x128xf32>
    %9 = arith.mulf %8, %8 : vector<64x128xf32>
    %10 = arith.mulf %8, %9 : vector<64x128xf32>
    %cst_6 = arith.constant 4.471500e-02 : f32
    %11 = vector.broadcast %cst_6 : f32 to vector<64x128xf32>
    %12 = arith.mulf %11, %10 : vector<64x128xf32>
    %13 = arith.addf %8, %12 : vector<64x128xf32>
    %cst_7 = arith.constant 0.797884583 : f32
    %14 = vector.broadcast %cst_7 : f32 to vector<64x128xf32>
    %15 = arith.mulf %14, %13 : vector<64x128xf32>
    %16 = math.tanh %15 : vector<64x128xf32>
    %cst_8 = arith.constant 1.000000e+00 : f32
    %17 = vector.broadcast %cst_8 : f32 to vector<64x128xf32>
    %18 = arith.addf %17, %16 : vector<64x128xf32>
    %cst_9 = arith.constant 5.000000e-01 : f32
    %19 = vector.broadcast %cst_9 : f32 to vector<64x128xf32>
    %20 = arith.mulf %19, %18 : vector<64x128xf32>
    %21 = arith.mulf %8, %20 : vector<64x128xf32>
    %c0_10 = arith.constant 0 : index
    %c0_11 = arith.constant 0 : index
    %22 = vector.load %arg10[%c0_10, %c0_11] : memref<64x128xf32, #tpu.memory_space<vmem>>, vector<64x128xf32>
    %23 = arith.truncf %21 : vector<64x128xf32> to vector<64x128xbf16>
    %c0_12 = arith.constant 0 : index
    %c0_13 = arith.constant 0 : index
    %24 = vector.load %arg6[%c0_12, %c0_13] : memref<128x128xbf16, #tpu.memory_space<vmem>>, vector<128x128xbf16>
    %cst_14 = arith.constant dense<0.000000e+00> : vector<64x128xf32>
    %25 = tpu.matmul %23, %24, %cst_14 {dimension_numbers = #tpu.dot_dimension_numbers<[1], [0], [0], [1], [0, 0, 1, 1], [], []>} : vector<64x128xbf16>, vector<128x128xbf16>, vector<64x128xf32> -> vector<64x128xf32>
    %26 = arith.addf %22, %25 : vector<64x128xf32>
    %c0_15 = arith.constant 0 : index
    %c0_16 = arith.constant 0 : index
    %27 = vector.load %arg10[%c0_15, %c0_16] : memref<64x128xf32, #tpu.memory_space<vmem>>, vector<64x128xf32>
    tpu.vector_store %arg10[%c0_15, %c0_16], %26 {strides = array<i32>} : memref<64x128xf32, #tpu.memory_space<vmem>>, vector<64x128xf32>,
    %c0_i32_17 = arith.constant 0 : i32
    %28 = arith.cmpi eq, %arg1, %c0_i32_17 : i32
    %29 = arith.extui %28 : i1 to i32
    %c0_i32_18 = arith.constant 0 : i32
    %30 = arith.cmpi ne, %29, %c0_i32_18 : i32
    scf.if %30 {
      %c0_19 = arith.constant 0 : index
      %c0_20 = arith.constant 0 : index
      %31 = vector.load %arg10[%c0_19, %c0_20] : memref<64x128xf32, #tpu.memory_space<vmem>>, vector<64x128xf32>
      %c0_21 = arith.constant 0 : index
      %c0_22 = arith.constant 0 : index
      %32 = vector.load %arg7[%c0_21, %c0_22] : memref<1x128xf32, #tpu.memory_space<vmem>>, vector<1x128xf32>
      %33 = vector.broadcast %32 : vector<1x128xf32> to vector<64x128xf32>
      %34 = arith.addf %31, %33 : vector<64x128xf32>
      %35 = arith.truncf %34 : vector<64x128xf32> to vector<64x128xbf16>
      %c0_23 = arith.constant 0 : index
      %c0_24 = arith.constant 0 : index
      %36 = vector.load %arg8[%c0_23, %c0_24] : memref<64x128xbf16, #tpu.memory_space<vmem>>, vector<64x128xbf16>
      tpu.vector_store %arg8[%c0_23, %c0_24], %35 {strides = array<i32>} : memref<64x128xbf16, #tpu.memory_space<vmem>>, vector<64x128xbf16>,
    } else {
    }
    return
  }
  func.func @transform_0(%arg0: i32, %arg1: i32) -> (i32, i32, i32, i32, i32) {
    %c0_i32 = arith.constant 0 : i32
    %c0_i32_0 = arith.constant 0 : i32
    %c0_i32_1 = arith.constant 0 : i32
    %c0_i32_2 = arith.constant 0 : i32
    %c0_i32_3 = arith.constant 0 : i32
    return %arg0, %c0_i32, %c0_i32_0, %c0_i32_1, %c0_i32_2 : i32, i32, i32, i32, i32
  }
  func.func @transform_1(%arg0: i32, %arg1: i32) -> (i32, i32, i32, i32, i32) {
    %c0_i32 = arith.constant 0 : i32
    %c1_i32 = arith.constant 1 : i32
    %c0_i32_0 = arith.constant 0 : i32
    %c0_i32_1 = arith.constant 0 : i32
    %c0_i32_2 = arith.constant 0 : i32
    return %arg0, %c0_i32, %c1_i32, %c0_i32_0, %c0_i32_1 : i32, i32, i32, i32, i32
  }
  func.func @transform_2(%arg0: i32, %arg1: i32) -> (i32, i32) {
    %c0_i32 = arith.constant 0 : i32
    %c0_i32_0 = arith.constant 0 : i32
    return %c0_i32, %arg1 : i32, i32
  }
  func.func @transform_3(%arg0: i32, %arg1: i32) -> (i32, i32) {
    %c0_i32 = arith.constant 0 : i32
    %c0_i32_0 = arith.constant 0 : i32
    return %c0_i32, %arg1 : i32, i32
  }
  func.func @transform_4(%arg0: i32, %arg1: i32) -> (i32, i32) {
    %c0_i32 = arith.constant 0 : i32
    %c0_i32_0 = arith.constant 0 : i32
    return %arg1, %c0_i32 : i32, i32
  }
  func.func @transform_5(%arg0: i32, %arg1: i32) -> (i32, i32) {
    %c0_i32 = arith.constant 0 : i32
    %c0_i32_0 = arith.constant 0 : i32
    %c0_i32_1 = arith.constant 0 : i32
    return %c0_i32, %c0_i32_0 : i32, i32
  }
  func.func @transform_6(%arg0: i32, %arg1: i32) -> (i32, i32) {
    %c0_i32 = arith.constant 0 : i32
    %c0_i32_0 = arith.constant 0 : i32
    return %arg0, %c0_i32 : i32, i32
  }
}

</mosaic_0001>

<llo_original>
// kernel: tpu_custom_call.1
$region0: #{tpu_custom_call.1}
  #allocation0 [shape = 'u32[]', space=smem, size = 0x4, offset = 0x4, fixed_abs, tag = 'smem constant byte address 0x4 - core index']
  #allocation1 [shape = 'u32[144,128]{1,0:T(1,128)}', space=vmem, size = 0x12000, scoped, tag = 'internal scratch']
  #allocation2 [shape = 'bf16[64,256]{1,0:T(16,128)(2,1)}', space=vmem, size = 0x8000, scoped, tag = 'scratch operand']
  #allocation3 [shape = 'f32[64,128]{1,0:T(8,128)}', space=vmem, size = 0x8000, scoped, tag = 'scratch operand']
  %s0 = inlined_call_operand.hbm [shape: bf16[2,8,2,8,128], index: 0, kind: input, shape index: {}]
  %s1 = inlined_call_operand.hbm [shape: bf16[2,8,2,8,128], index: 1, kind: input, shape index: {}]
  %s2 = inlined_call_operand.hbm [shape: bf16[256,128], index: 2, kind: input, shape index: {}]
  %s3 = inlined_call_operand.hbm [shape: f32[1,128], index: 3, kind: input, shape index: {}]
  %s4 = inlined_call_operand.hbm [shape: bf16[128,128], index: 4, kind: input, shape index: {}]
  %s5 = inlined_call_operand.hbm [shape: f32[1,128], index: 5, kind: input, shape index: {}]
  %s6 = inlined_call_operand.hbm [shape: bf16[128,128], index: 6, kind: output, shape index: {}]
  %s7 = sld [smem:[#allocation0]]
  $region89: #{tpu_custom_call.1} parent=0
    _
  %s9 = ssub.s32 1, %s7
  %s10 = scalar_select 0, %s9, %s7
  $region1: #{tpu_custom_call.1} parent=0
    #allocation4 [shape = 'u8[32768]{0}', space=vmem, size = 0x8000, scoped, tag = 'input window, operand 0']
    #allocation5 [shape = 's32[2]{0}', space=sflag, size = 0x8, scoped, tag = 'scoped memory for tpu_custom_call.1']
    #allocation6 [shape = 's32[2]{0}', space=sflag, size = 0x8, scoped, tag = 'scoped memory for tpu_custom_call.1']
    #allocation7 [shape = 'u8[32768]{0}', space=vmem, size = 0x8000, scoped, tag = 'input window, operand 1']
    #allocation8 [shape = 's32[2]{0}', space=sflag, size = 0x8, scoped, tag = 'scoped memory for tpu_custom_call.1']
    #allocation9 [shape = 'u8[65536]{0}', space=vmem, size = 0x10000, scoped, tag = 'input window, operand 2, single buffered']
    #allocation10 [shape = 'u8[512]{0}', space=vmem, size = 0x400, scoped, tag = 'input window, operand 3, single buffered']
    #allocation11 [shape = 's32[1]{0}', space=sflag, size = 0x4, scoped, tag = 'scoped memory for tpu_custom_call.1']
    #allocation12 [shape = 'u8[32768]{0}', space=vmem, size = 0x8000, scoped, tag = 'input window, operand 4, single buffered']
    #allocation13 [shape = 'u8[512]{0}', space=vmem, size = 0x400, scoped, tag = 'input window, operand 5, single buffered']
    #allocation14 [shape = 's32[1]{0}', space=sflag, size = 0x4, scoped, tag = 'scoped memory for tpu_custom_call.1']
    #allocation15 [shape = 'u8[32768]{0}', space=vmem, size = 0x8000, scoped, tag = 'output window, operand 0']
    %11 = vsyncpa [#allocation5], 0
    %s12 = scalar_lea.sflag [#allocation5], 1
    %13 = vsyncpa %s12, 0
    %14 = vsyncpa [#allocation8], 0
    %s15 = scalar_lea.sflag [#allocation8], 1
    %16 = vsyncpa %s15, 0
    %17 = vsyncpa [#allocation11], 0
    %18 = vsyncpa [#allocation14], 0
    %19 = vsyncpa [#allocation6], 0
    %s20 = scalar_lea.sflag [#allocation6], 1
    %21 = vsyncpa %s20, 0
    loop: start=0, step=1, limit=4
    $region2: #{tpu_custom_call.1} parent=1 // loop_pre_header
      _
    $region3: #{tpu_custom_call.1} parent=1 // loop_header
      %s23 = sphi 0, %s27
      %p24 = scmp.ge.s32.totalorder %s23, 4
      %s30 = sphi 0, %s42
      %s31 = sphi 0, %s38
      %s32 = sphi 0, %s30
      %s33 = sphi 0, %s31
      %s34 = sphi 0, %s32
      %s35 = sphi 0, %s33
      %s45 = sphi 0, %s47
      %s48 = sphi 0, %s45
      %s49 = sphi 0, %s48
      %s65 = sphi 0, %s49
      %s71 = sphi 0, %s73
      %s74 = sphi 0, %s71
      %s75 = sphi 0, %s74
      %s91 = sphi 0, %s75
      %s97 = sphi 0, %s99
      %s100 = sphi 0, %s97
      %s101 = sphi 0, %s100
      %s117 = sphi 0, %s101
      %s123 = sphi 0, %s125
      %s126 = sphi 0, %s123
      %s127 = sphi 0, %s126
      %s143 = sphi 0, %s127
      %s149 = sphi 0, %s151
      %s152 = sphi 0, %s149
      %s153 = sphi 0, %s152
      %s169 = sphi 0, %s153
      %s173 = sphi 0, %s173
      %s175 = sphi 0, %s173
      %s176 = sphi 0, %s175
      %s190 = sphi 0, %s176
      %s196 = sphi 0, %s198
      %s199 = sphi 0, %s196
      %s200 = sphi 0, %s199
      %s216 = sphi 0, %s200
    $region4: #{tpu_custom_call.1} parent=1 // loop_header_branch
      %26 = sbr.rel (%p24) target = $region8
    $region5: #{tpu_custom_call.1} parent=1 // loop_body
      %s28 = ssub.s32 %s23, 1
      %s29 = ssub.s32 %s23, 2
      %s36 = sadd.s32 1, %s31
      %p37 = scmp.ge.s32.totalorder %s36, 1
      %s38 = scalar_select %p37, 0, %s36
      %s39 = sadd.s32 1, %s30
      %s40 = scalar_select %p37, %s39, %s30
      %p41 = scmp.ge.s32.totalorder %s40, 2
      %s42 = scalar_select %p41, 0, %s40
      %s43 = ssub.s32 %s30, %s42
      %p44 = scmp.eq.s32.totalorder %s43, 0
      %s46 = sadd.s32 %s45, 1
      %s47 = scalar_select %p44, %s45, %s46
      %p50 = pneg %p44
      %p51 = scmp.eq.s32.totalorder %s23, 1
      %p52 = por %p50, %p51
      %p53 = scmp.ne.s32.totalorder %s45, %s48
      %p54 = scmp.eq.s32.totalorder %s23, 0
      %p55 = por %p53, %p54
      %p56 = scmp.ne.s32.totalorder %s45, %s48
      %p57 = scmp.eq.s32.totalorder %s28, 1
      %p58 = por %p56, %p57
      %p59 = scmp.ne.s32.totalorder %s48, %s49
      %p60 = scmp.eq.s32.totalorder %s28, 0
      %p61 = por %p59, %p60
      %p62 = scmp.ne.s32.totalorder %s48, %s49
      %p63 = scmp.eq.s32.totalorder %s29, 1
      %p64 = por %p62, %p63
      %p66 = scmp.ne.s32.totalorder %s49, %s65
      %p67 = scmp.eq.s32.totalorder %s29, 0
      %p68 = por %p66, %p67
      %s69 = ssub.s32 %s30, %s42
      %p70 = scmp.eq.s32.totalorder %s69, 0
      %s72 = sadd.s32 %s71, 1
      %s73 = scalar_select %p70, %s71, %s72
      %p76 = pneg %p70
      %p77 = scmp.eq.s32.totalorder %s23, 1
      %p78 = por %p76, %p77
      %p79 = scmp.ne.s32.totalorder %s71, %s74
      %p80 = scmp.eq.s32.totalorder %s23, 0
      %p81 = por %p79, %p80
      %p82 = scmp.ne.s32.totalorder %s71, %s74
      %p83 = scmp.eq.s32.totalorder %s28, 1
      %p84 = por %p82, %p83
      %p85 = scmp.ne.s32.totalorder %s74, %s75
      %p86 = scmp.eq.s32.totalorder %s28, 0
      %p87 = por %p85, %p86
      %p88 = scmp.ne.s32.totalorder %s74, %s75
      %p89 = scmp.eq.s32.totalorder %s29, 1
      %p90 = por %p88, %p89
      %p92 = scmp.ne.s32.totalorder %s75, %s91
      %p93 = scmp.eq.s32.totalorder %s29, 0
      %p94 = por %p92, %p93
      %s95 = ssub.s32 %s31, %s38
      %p96 = scmp.eq.s32.totalorder %s95, 0
      %s98 = sadd.s32 %s97, 1
      %s99 = scalar_select %p96, %s97, %s98
      %p102 = pneg %p96
      %p103 = scmp.eq.s32.totalorder %s23, 1
      %p104 = por %p102, %p103
      %p105 = scmp.ne.s32.totalorder %s97, %s100
      %p106 = scmp.eq.s32.totalorder %s23, 0
      %p107 = por %p105, %p106
      %p108 = scmp.ne.s32.totalorder %s97, %s100
      %p109 = scmp.eq.s32.totalorder %s28, 1
      %p110 = por %p108, %p109
      %p111 = scmp.ne.s32.totalorder %s100, %s101
      %p112 = scmp.eq.s32.totalorder %s28, 0
      %p113 = por %p111, %p112
      %p114 = scmp.ne.s32.totalorder %s100, %s101
      %p115 = scmp.eq.s32.totalorder %s29, 1
      %p116 = por %p114, %p115
      %p118 = scmp.ne.s32.totalorder %s101, %s117
      %p119 = scmp.eq.s32.totalorder %s29, 0
      %p120 = por %p118, %p119
      %s121 = ssub.s32 %s31, %s38
      %p122 = scmp.eq.s32.totalorder %s121, 0
      %s124 = sadd.s32 %s123, 1
      %s125 = scalar_select %p122, %s123, %s124
      %p128 = pneg %p122
      %p129 = scmp.eq.s32.totalorder %s23, 1
      %p130 = por %p128, %p129
      %p131 = scmp.ne.s32.totalorder %s123, %s126
      %p132 = scmp.eq.s32.totalorder %s23, 0
      %p133 = por %p131, %p132
      %p134 = scmp.ne.s32.totalorder %s123, %s126
      %p135 = scmp.eq.s32.totalorder %s28, 1
      %p136 = por %p134, %p135
      %p137 = scmp.ne.s32.totalorder %s126, %s127
      %p138 = scmp.eq.s32.totalorder %s28, 0
      %p139 = por %p137, %p138
      %p140 = scmp.ne.s32.totalorder %s126, %s127
      %p141 = scmp.eq.s32.totalorder %s29, 1
      %p142 = por %p140, %p141
      %p144 = scmp.ne.s32.totalorder %s127, %s143
      %p145 = scmp.eq.s32.totalorder %s29, 0
      %p146 = por %p144, %p145
      %s147 = ssub.s32 %s31, %s38
      %p148 = scmp.eq.s32.totalorder %s147, 0
      %s150 = sadd.s32 %s149, 1
      %s151 = scalar_select %p148, %s149, %s150
      %p154 = pneg %p148
      %p155 = scmp.eq.s32.totalorder %s23, 1
      %p156 = por %p154, %p155
      %p157 = scmp.ne.s32.totalorder %s149, %s152
      %p158 = scmp.eq.s32.totalorder %s23, 0
      %p159 = por %p157, %p158
      %p160 = scmp.ne.s32.totalorder %s149, %s152
      %p161 = scmp.eq.s32.totalorder %s28, 1
      %p162 = por %p160, %p161
      %p163 = scmp.ne.s32.totalorder %s152, %s153
      %p164 = scmp.eq.s32.totalorder %s28, 0
      %p165 = por %p163, %p164
      %p166 = scmp.ne.s32.totalorder %s152, %s153
      %p167 = scmp.eq.s32.totalorder %s29, 1
      %p168 = por %p166, %p167
      %p170 = scmp.ne.s32.totalorder %s153, %s169
      %p171 = scmp.eq.s32.totalorder %s29, 0
      %p172 = por %p170, %p171
      %s174 = sadd.s32 %s173, 1
      %p177 = scmp.eq.s32.totalorder %s23, 1
      %p178 = scmp.ne.s32.totalorder %s173, %s175
      %p179 = scmp.eq.s32.totalorder %s23, 0
      %p180 = por %p178, %p179
      %p181 = scmp.ne.s32.totalorder %s173, %s175
      %p182 = scmp.eq.s32.totalorder %s28, 1
      %p183 = por %p181, %p182
      %p184 = scmp.ne.s32.totalorder %s175, %s176
      %p185 = scmp.eq.s32.totalorder %s28, 0
      %p186 = por %p184, %p185
      %p187 = scmp.ne.s32.totalorder %s175, %s176
      %p188 = scmp.eq.s32.totalorder %s29, 1
      %p189 = por %p187, %p188
      %p191 = scmp.ne.s32.totalorder %s176, %s190
      %p192 = scmp.eq.s32.totalorder %s29, 0
      %p193 = por %p191, %p192
      %s194 = ssub.s32 %s30, %s42
      %p195 = scmp.eq.s32.totalorder %s194, 0
      %s197 = sadd.s32 %s196, 1
      %s198 = scalar_select %p195, %s196, %s197
      %p201 = pneg %p195
      %p202 = scmp.eq.s32.totalorder %s23, 1
      %p203 = por %p201, %p202
      %p204 = scmp.ne.s32.totalorder %s196, %s199
      %p205 = scmp.eq.s32.totalorder %s23, 0
      %p206 = por %p204, %p205
      %p207 = scmp.ne.s32.totalorder %s196, %s199
      %p208 = scmp.eq.s32.totalorder %s28, 1
      %p209 = por %p207, %p208
      %p210 = scmp.ne.s32.totalorder %s199, %s200
      %p211 = scmp.eq.s32.totalorder %s28, 0
      %p212 = por %p210, %p211
      %p213 = scmp.ne.s32.totalorder %s199, %s200
      %p214 = scmp.eq.s32.totalorder %s29, 1
      %p215 = por %p213, %p214
      %p217 = scmp.ne.s32.totalorder %s200, %s216
      %p218 = scmp.eq.s32.totalorder %s29, 0
      %p219 = por %p217, %p218
      %p220 = scmp.le.s32.totalorder 1, %s23
      %p221 = scmp.lt.s32.totalorder %s23, 3
      %p222 = pnand %p220, %p221
      %p223 = pneg %p222
      // Predicated region
      $region9: #{tpu_custom_call.1} parent=5 // pred_check
        _
      $region10: #{tpu_custom_call.1} parent=5 // pred_check_branch
        %225 = sbr.rel (%p222) target = $region12
      $region11: #{tpu_custom_call.1} parent=5 // pred_region
        %s226 = ssub.s32 %s23, 1
        // Predicated region
        $region13: #{tpu_custom_call.1} parent=11 // pred_check
          %p227 = pneg %p113
        $region14: #{tpu_custom_call.1} parent=11 // pred_check_branch
          %229 = sbr.rel (%p227) target = $region16
        $region15: #{tpu_custom_call.1} parent=11 // pred_region
          %s231 = ssub.s32 2048, 2048
          %232 = vsyncadd [#allocation8], %s231
          %s233 = smul.addr %s33, 64
          %s234 = scalar_lea.hbm %s2, %s233
          %s235 = sshll.u32 [#allocation9], 4
          %s236 = int_to_ptr.vmem [resolvable:$true] %s235
          %241 = dma.hbm_to_vmem [thread:$0]  %s234, 2048, %s236, [#allocation8], 64, 64, 4
        $region16: #{tpu_custom_call.1} parent=11 // pred_fallthru
          _
        // Predicated region
        $region17: #{tpu_custom_call.1} parent=11 // pred_check
          %p242 = pneg %p139
        $region18: #{tpu_custom_call.1} parent=11 // pred_check_branch
          %244 = sbr.rel (%p242) target = $region20
        $region19: #{tpu_custom_call.1} parent=11 // pred_region
          %s246 = ssub.s32 16, 16
          %247 = vsyncadd [#allocation11], %s246
          %s248 = smul.addr %s33, 16
          %s249 = scalar_lea.hbm %s3, %s248
          %s251 = sshll.u32 [#allocation10], 4
          %s252 = int_to_ptr.vmem [resolvable:$true] %s251
          %254 = dma.hbm_to_vmem [thread:$0]  %s249, 16, %s252, [#allocation11]
        $region20: #{tpu_custom_call.1} parent=11 // pred_fallthru
          _
        // Predicated region
        $region21: #{tpu_custom_call.1} parent=11 // pred_check
          %p255 = pneg %p165
        $region22: #{tpu_custom_call.1} parent=11 // pred_check_branch
          %257 = sbr.rel (%p255) target = $region24
        $region23: #{tpu_custom_call.1} parent=11 // pred_region
          %s258 = smul.u32 16, %s33
          %s260 = ssub.s32 1024, 1024
          %261 = vsyncadd [#allocation11], %s260
          %s262 = smul.addr %s258, 64
          %s263 = scalar_lea.hbm %s4, %s262
          %s264 = sshll.u32 [#allocation12], 4
          %s265 = int_to_ptr.vmem [resolvable:$true] %s264
          %270 = dma.hbm_to_vmem [thread:$0]  %s263, 1024, %s265, [#allocation11], 64, 64, 4
        $region24: #{tpu_custom_call.1} parent=11 // pred_fallthru
          _
        // Predicated region
        $region25: #{tpu_custom_call.1} parent=11 // pred_check
          %p271 = pneg %p186
        $region26: #{tpu_custom_call.1} parent=11 // pred_check_branch
          %273 = sbr.rel (%p271) target = $region28
        $region27: #{tpu_custom_call.1} parent=11 // pred_region
          %s275 = ssub.s32 16, 16
          %276 = vsyncadd [#allocation14], %s275
          %s278 = sshll.u32 [#allocation13], 4
          %s279 = int_to_ptr.vmem [resolvable:$true] %s278
          %281 = dma.hbm_to_vmem [thread:$0]  %s5, 16, %s279, [#allocation14]
        $region28: #{tpu_custom_call.1} parent=11 // pred_fallthru
          _
      $region12: #{tpu_custom_call.1} parent=5 // pred_fallthru
        _
      %p282 = scmp.lt.s32.totalorder %s23, 2
      // Predicated region
      $region29: #{tpu_custom_call.1} parent=5 // pred_check
        %p283 = pneg %p282
      $region30: #{tpu_custom_call.1} parent=5 // pred_check_branch
        %285 = sbr.rel (%p283) target = $region32
      $region31: #{tpu_custom_call.1} parent=5 // pred_region
        // Predicated region
        $region33: #{tpu_custom_call.1} parent=31 // pred_check
          %p286 = pneg %p55
        $region34: #{tpu_custom_call.1} parent=31 // pred_check_branch
          %288 = sbr.rel (%p286) target = $region36
        $region35: #{tpu_custom_call.1} parent=31 // pred_region
          %s289 = sand.u32 %s45, 1
          %s290 = scalar_lea.sflag [#allocation5], %s289
          %s291 = sand.u32 %s45, 1
          %s292 = smul.addr %s291, 32
          %s293 = scalar_lea.vmem [#allocation4], %s292
          %s295 = ssub.s32 512, 512
          %296 = vsyncadd %s290, %s295
          %s297 = smul.addr %s30, 16
          %s298 = smul.addr %s297, 64
          %s299 = scalar_lea.hbm %s0, %s298
          %s300 = sshll.u32 %s293, 4
          %s301 = int_to_ptr.vmem [resolvable:$true] %s300
          %306 = dma.hbm_to_vmem [thread:$0]  %s299, 512, %s301, %s290, 128, 64, 4
        $region36: #{tpu_custom_call.1} parent=31 // pred_fallthru
          _
        // Predicated region
        $region37: #{tpu_custom_call.1} parent=31 // pred_check
          %p307 = pneg %p81
        $region38: #{tpu_custom_call.1} parent=31 // pred_check_branch
          %309 = sbr.rel (%p307) target = $region40
        $region39: #{tpu_custom_call.1} parent=31 // pred_region
          %s310 = sand.u32 %s23, 1
          %s311 = scalar_lea.sflag [#allocation8], %s310
          %s312 = sand.u32 %s71, 1
          %s313 = smul.addr %s312, 32
          %s314 = scalar_lea.vmem [#allocation7], %s313
          %s316 = ssub.s32 512, 512
          %317 = vsyncadd %s311, %s316
          %s318 = smul.addr %s30, 16
          %s319 = sadd.s32 1, %s318
          %s320 = smul.addr %s319, 64
          %s321 = scalar_lea.hbm %s1, %s320
          %s322 = sshll.u32 %s314, 4
          %s323 = int_to_ptr.vmem [resolvable:$true] %s322
          %328 = dma.hbm_to_vmem [thread:$0]  %s321, 512, %s323, %s311, 128, 64, 4
        $region40: #{tpu_custom_call.1} parent=31 // pred_fallthru
          _
      $region32: #{tpu_custom_call.1} parent=5 // pred_fallthru
        _
      %p329 = scmp.le.s32.totalorder 1, %s23
      %p330 = scmp.lt.s32.totalorder %s23, 3
      %p331 = pnand %p329, %p330
      %p332 = pneg %p331
      // Predicated region
      $region41: #{tpu_custom_call.1} parent=5 // pred_check
        _
      $region42: #{tpu_custom_call.1} parent=5 // pred_check_branch
        %334 = sbr.rel (%p331) target = $region44
      $region43: #{tpu_custom_call.1} parent=5 // pred_region
        %s335 = ssub.s32 %s23, 1
        %s336 = sand.u32 %s48, 1
        %s337 = scalar_lea.sflag [#allocation5], %s336
        %s338 = sand.u32 %s48, 1
        %s339 = smul.addr %s338, 32
        %s340 = scalar_lea.vmem [#allocation4], %s339
        // Predicated region
        $region45: #{tpu_custom_call.1} parent=43 // pred_check
          %p341 = pneg %p61
        $region46: #{tpu_custom_call.1} parent=43 // pred_check_branch
          %343 = sbr.rel (%p341) target = $region48
        $region47: #{tpu_custom_call.1} parent=43 // pred_region
          %344 = dma.done %s337, 512
        $region48: #{tpu_custom_call.1} parent=43 // pred_fallthru
          _
        %s345 = sand.u32 %s28, 1
        %s346 = scalar_lea.sflag [#allocation8], %s345
        %s347 = sand.u32 %s74, 1
        %s348 = smul.addr %s347, 32
        %s349 = scalar_lea.vmem [#allocation7], %s348
        // Predicated region
        $region49: #{tpu_custom_call.1} parent=43 // pred_check
          %p350 = pneg %p87
        $region50: #{tpu_custom_call.1} parent=43 // pred_check_branch
          %352 = sbr.rel (%p350) target = $region52
        $region51: #{tpu_custom_call.1} parent=43 // pred_region
          %353 = dma.done %s346, 512
        $region52: #{tpu_custom_call.1} parent=43 // pred_fallthru
          _
        // Predicated region
        $region53: #{tpu_custom_call.1} parent=43 // pred_check
          %p354 = pneg %p113
        $region54: #{tpu_custom_call.1} parent=43 // pred_check_branch
          %356 = sbr.rel (%p354) target = $region56
        $region55: #{tpu_custom_call.1} parent=43 // pred_region
          %357 = dma.done [#allocation8], 2048
        $region56: #{tpu_custom_call.1} parent=43 // pred_fallthru
          _
        // Predicated region
        $region57: #{tpu_custom_call.1} parent=43 // pred_check
          %p358 = pneg %p139
        $region58: #{tpu_custom_call.1} parent=43 // pred_check_branch
          %360 = sbr.rel (%p358) target = $region60
        $region59: #{tpu_custom_call.1} parent=43 // pred_region
          %361 = dma.done [#allocation11], 16
        $region60: #{tpu_custom_call.1} parent=43 // pred_fallthru
          _
        // Predicated region
        $region61: #{tpu_custom_call.1} parent=43 // pred_check
          %p362 = pneg %p165
        $region62: #{tpu_custom_call.1} parent=43 // pred_check_branch
          %364 = sbr.rel (%p362) target = $region64
        $region63: #{tpu_custom_call.1} parent=43 // pred_region
          %365 = dma.done [#allocation11], 1024
        $region64: #{tpu_custom_call.1} parent=43 // pred_fallthru
          _
        // Predicated region
        $region65: #{tpu_custom_call.1} parent=43 // pred_check
          %p366 = pneg %p186
        $region66: #{tpu_custom_call.1} parent=43 // pred_check_branch
          %368 = sbr.rel (%p366) target = $region68
        $region67: #{tpu_custom_call.1} parent=43 // pred_region
          %369 = dma.done [#allocation14], 16
        $region68: #{tpu_custom_call.1} parent=43 // pred_fallthru
          _
        %s370 = sand.u32 %s48, 1
        %s371 = scalar_lea.sflag [#allocation5], %s370
        %s372 = sand.u32 %s48, 1
        %s373 = smul.addr %s372, 32
        %s374 = scalar_lea.vmem [#allocation4], %s373
        %p375 = pneg %p61
        %p376 = pneg %p58
        %s377 = sand.u32 %s28, 1
        %s378 = scalar_lea.sflag [#allocation8], %s377
        %s379 = sand.u32 %s74, 1
        %s380 = smul.addr %s379, 32
        %s381 = scalar_lea.vmem [#allocation7], %s380
        %p382 = pneg %p87
        %p383 = pneg %p84
        %p384 = pneg %p113
        %p385 = pneg %p110
        %p386 = pneg %p139
        %p387 = pneg %p136
        %p388 = pneg %p165
        %p389 = pneg %p162
        %p390 = pneg %p186
        %p391 = pneg %p183
        %p392 = pneg %p212
        %p393 = pneg %p209
        %s394 = sand.u32 %s199, 1
        %s395 = scalar_lea.sflag [#allocation6], %s394
        %s396 = sand.u32 %s199, 1
        %s397 = smul.addr %s396, 32
        %s398 = scalar_lea.vmem [#allocation15], %s397
        %s399 = smul.u32 16, %s33
        %s400 = smul.u32 8, %s32
        %p402 = scmp.eq.s32.totalorder %s33, 0
        // Predicated region
        $region69: #{tpu_custom_call.1} parent=43 // pred_check
          %p403 = pneg %p402
        $region70: #{tpu_custom_call.1} parent=43 // pred_check_branch
          %405 = sbr.rel (%p403) target = $region72
        $region71: #{tpu_custom_call.1} parent=43 // pred_region
          %v406 = vld [vmem:[%s340] sm:$0xf]
          %v407 = vld [vmem:[%s340 + $0x4] sm:$0xf]
          %v408 = vld [vmem:[%s340 + $0x8] sm:$0xf]
          %v409 = vld [vmem:[%s340 + $0xc] sm:$0xf]
          %v410 = vld [vmem:[%s340 + $0x10] sm:$0xf]
          %v411 = vld [vmem:[%s340 + $0x14] sm:$0xf]
          %v412 = vld [vmem:[%s340 + $0x18] sm:$0xf]
          %v413 = vld [vmem:[%s340 + $0x1c] sm:$0xf]
          %v414 = vunpack.c.l.bf16 %v406
          %v415 = vunpack.c.l.bf16 %v407
          %v416 = vunpack.c.l.bf16 %v408
          %v417 = vunpack.c.l.bf16 %v409
          %v418 = vunpack.c.l.bf16 %v410
          %v419 = vunpack.c.l.bf16 %v411
          %v420 = vunpack.c.l.bf16 %v412
          %v421 = vunpack.c.l.bf16 %v413
          %v422 = vld [vmem:[%s349] sm:$0xf]
          %v423 = vld [vmem:[%s349 + $0x4] sm:$0xf]
          %v424 = vld [vmem:[%s349 + $0x8] sm:$0xf]
          %v425 = vld [vmem:[%s349 + $0xc] sm:$0xf]
          %v426 = vld [vmem:[%s349 + $0x10] sm:$0xf]
          %v427 = vld [vmem:[%s349 + $0x14] sm:$0xf]
          %v428 = vld [vmem:[%s349 + $0x18] sm:$0xf]
          %v429 = vld [vmem:[%s349 + $0x1c] sm:$0xf]
          %v430 = vunpack.c.l.bf16 %v422
          %v431 = vunpack.c.l.bf16 %v423
          %v432 = vunpack.c.l.bf16 %v424
          %v433 = vunpack.c.l.bf16 %v425
          %v434 = vunpack.c.l.bf16 %v426
          %v435 = vunpack.c.l.bf16 %v427
          %v436 = vunpack.c.l.bf16 %v428
          %v437 = vunpack.c.l.bf16 %v429
          %v438 = vadd.f32 %v414, %v430
          %439 = vadd.xlane.f32.xlu0 %v438
          %v440 = vpop.xlane.xlu0 %439
          %v441 = vadd.f32 %v415, %v431
          %442 = vadd.xlane.f32.xlu0 %v441
          %v443 = vpop.xlane.xlu0 %442
          %v444 = vadd.f32 %v416, %v432
          %445 = vadd.xlane.f32.xlu0 %v444
          %v446 = vpop.xlane.xlu0 %445
          %v447 = vadd.f32 %v417, %v433
          %448 = vadd.xlane.f32.xlu0 %v447
          %v449 = vpop.xlane.xlu0 %448
          %v450 = vadd.f32 %v418, %v434
          %451 = vadd.xlane.f32.xlu0 %v450
          %v452 = vpop.xlane.xlu0 %451
          %v453 = vadd.f32 %v419, %v435
          %454 = vadd.xlane.f32.xlu0 %v453
          %v455 = vpop.xlane.xlu0 %454
          %v456 = vadd.f32 %v420, %v436
          %457 = vadd.xlane.f32.xlu0 %v456
          %v458 = vpop.xlane.xlu0 %457
          %v459 = vadd.f32 %v421, %v437
          %460 = vadd.xlane.f32.xlu0 %v459
          %v461 = vpop.xlane.xlu0 %460
          %v462 = vrcp.pop 256.0
          %v463 = vmul.f32 %v440, %v462
          %v464 = vmul.f32 %v443, %v462
          %v465 = vmul.f32 %v446, %v462
          %v466 = vmul.f32 %v449, %v462
          %v467 = vmul.f32 %v452, %v462
          %v468 = vmul.f32 %v455, %v462
          %v469 = vmul.f32 %v458, %v462
          %v470 = vmul.f32 %v461, %v462
          %v471 = vsub.f32 %v414, %v463
          %v472 = vsub.f32 %v430, %v463
          %v473 = vsub.f32 %v415, %v464
          %v474 = vsub.f32 %v431, %v464
          %v475 = vsub.f32 %v416, %v465
          %v476 = vsub.f32 %v432, %v465
          %v477 = vsub.f32 %v417, %v466
          %v478 = vsub.f32 %v433, %v466
          %v479 = vsub.f32 %v418, %v467
          %v480 = vsub.f32 %v434, %v467
          %v481 = vsub.f32 %v419, %v468
          %v482 = vsub.f32 %v435, %v468
          %v483 = vsub.f32 %v420, %v469
          %v484 = vsub.f32 %v436, %v469
          %v485 = vsub.f32 %v421, %v470
          %v486 = vsub.f32 %v437, %v470
          %v487 = vmul.f32 %v471, %v471
          %v488 = vmul.f32 %v472, %v472
          %v489 = vmul.f32 %v473, %v473
          %v490 = vmul.f32 %v474, %v474
          %v491 = vmul.f32 %v475, %v475
          %v492 = vmul.f32 %v476, %v476
          %v493 = vmul.f32 %v477, %v477
          %v494 = vmul.f32 %v478, %v478
          %v495 = vmul.f32 %v479, %v479
          %v496 = vmul.f32 %v480, %v480
          %v497 = vmul.f32 %v481, %v481
          %v498 = vmul.f32 %v482, %v482
          %v499 = vmul.f32 %v483, %v483
          %v500 = vmul.f32 %v484, %v484
          %v501 = vmul.f32 %v485, %v485
          %v502 = vmul.f32 %v486, %v486
          %v503 = vadd.f32 %v487, %v488
          %504 = vadd.xlane.f32.xlu0 %v503
          %v505 = vpop.xlane.xlu0 %504
          %v506 = vadd.f32 %v489, %v490
          %507 = vadd.xlane.f32.xlu0 %v506
          %v508 = vpop.xlane.xlu0 %507
          %v509 = vadd.f32 %v491, %v492
          %510 = vadd.xlane.f32.xlu0 %v509
          %v511 = vpop.xlane.xlu0 %510
          %v512 = vadd.f32 %v493, %v494
          %513 = vadd.xlane.f32.xlu0 %v512
          %v514 = vpop.xlane.xlu0 %513
          %v515 = vadd.f32 %v495, %v496
          %516 = vadd.xlane.f32.xlu0 %v515
          %v517 = vpop.xlane.xlu0 %516
          %v518 = vadd.f32 %v497, %v498
          %519 = vadd.xlane.f32.xlu0 %v518
          %v520 = vpop.xlane.xlu0 %519
          %v521 = vadd.f32 %v499, %v500
          %522 = vadd.xlane.f32.xlu0 %v521
          %v523 = vpop.xlane.xlu0 %522
          %v524 = vadd.f32 %v501, %v502
          %525 = vadd.xlane.f32.xlu0 %v524
          %v526 = vpop.xlane.xlu0 %525
          %v527 = vmul.f32 %v505, %v462
          %v528 = vmul.f32 %v508, %v462
          %v529 = vmul.f32 %v511, %v462
          %v530 = vmul.f32 %v514, %v462
          %v531 = vmul.f32 %v517, %v462
          %v532 = vmul.f32 %v520, %v462
          %v533 = vmul.f32 %v523, %v462
          %v534 = vmul.f32 %v526, %v462
          %v535 = vadd.f32 %v527, 1e-05
          %v536 = vadd.f32 %v528, 1e-05
          %v537 = vadd.f32 %v529, 1e-05
          %v538 = vadd.f32 %v530, 1e-05
          %v539 = vadd.f32 %v531, 1e-05
          %v540 = vadd.f32 %v532, 1e-05
          %v541 = vadd.f32 %v533, 1e-05
          %v542 = vadd.f32 %v534, 1e-05
          %v543 = vrsqrt.pop %v535
          %v544 = vrsqrt.pop %v536
          %v545 = vrsqrt.pop %v537
          %v546 = vrsqrt.pop %v538
          %v547 = vrsqrt.pop %v539
          %v548 = vrsqrt.pop %v540
          %v549 = vrsqrt.pop %v541
          %v550 = vrsqrt.pop %v542
          %v551 = vmul.f32 %v471, %v543
          %v552 = vmul.f32 %v472, %v543
          %v553 = vmul.f32 %v473, %v544
          %v554 = vmul.f32 %v474, %v544
          %v555 = vmul.f32 %v475, %v545
          %v556 = vmul.f32 %v476, %v545
          %v557 = vmul.f32 %v477, %v546
          %v558 = vmul.f32 %v478, %v546
          %v559 = vmul.f32 %v479, %v547
          %v560 = vmul.f32 %v480, %v547
          %v561 = vmul.f32 %v481, %v548
          %v562 = vmul.f32 %v482, %v548
          %v563 = vmul.f32 %v483, %v549
          %v564 = vmul.f32 %v484, %v549
          %v565 = vmul.f32 %v485, %v550
          %v566 = vmul.f32 %v486, %v550
          %v567 = vpack.c.bf16 %v553, %v551
          %v568 = vpack.c.bf16 %v554, %v552
          %v569 = vpack.c.bf16 %v557, %v555
          %v570 = vpack.c.bf16 %v558, %v556
          %v571 = vpack.c.bf16 %v561, %v559
          %v572 = vpack.c.bf16 %v562, %v560
          %v573 = vpack.c.bf16 %v565, %v563
          %v574 = vpack.c.bf16 %v566, %v564
          %575 = vst [vmem:[#allocation2] sm:$0xff] %v567
          %576 = vst [vmem:[#allocation2 + $0x8] sm:$0xff] %v568
          %577 = vst [vmem:[#allocation2 + $0x10] sm:$0xff] %v569
          %578 = vst [vmem:[#allocation2 + $0x18] sm:$0xff] %v570
          %579 = vst [vmem:[#allocation2 + $0x20] sm:$0xff] %v571
          %580 = vst [vmem:[#allocation2 + $0x28] sm:$0xff] %v572
          %581 = vst [vmem:[#allocation2 + $0x30] sm:$0xff] %v573
          %582 = vst [vmem:[#allocation2 + $0x38] sm:$0xff] %v574
          %583 = vst [vmem:[#allocation3] sm:$0xff] 0.0
          %584 = vst [vmem:[#allocation3 + $0x8] sm:$0xff] 0.0
          %585 = vst [vmem:[#allocation3 + $0x10] sm:$0xff] 0.0
          %586 = vst [vmem:[#allocation3 + $0x18] sm:$0xff] 0.0
          %587 = vst [vmem:[#allocation3 + $0x20] sm:$0xff] 0.0
          %588 = vst [vmem:[#allocation3 + $0x28] sm:$0xff] 0.0
          %589 = vst [vmem:[#allocation3 + $0x30] sm:$0xff] 0.0
          %590 = vst [vmem:[#allocation3 + $0x38] sm:$0xff] 0.0
        $region72: #{tpu_custom_call.1} parent=43 // pred_fallthru
          _
        %v591 = vld [vmem:[#allocation2] sm:$0xff]
        %v592 = vld [vmem:[#allocation2 + $0x8] sm:$0xff]
        %v593 = vld [vmem:[#allocation2 + $0x10] sm:$0xff]
        %v594 = vld [vmem:[#allocation2 + $0x18] sm:$0xff]
        %v595 = vld [vmem:[#allocation2 + $0x20] sm:$0xff]
        %v596 = vld [vmem:[#allocation2 + $0x28] sm:$0xff]
        %v597 = vld [vmem:[#allocation2 + $0x30] sm:$0xff]
        %v598 = vld [vmem:[#allocation2 + $0x38] sm:$0xff]
        %v599 = vld [vmem:[#allocation9] sm:$0xf]
        %v600 = vld [vmem:[#allocation9 + $0x4] sm:$0xf]
        %v601 = vld [vmem:[#allocation9 + $0x8] sm:$0xf]
        %v602 = vld [vmem:[#allocation9 + $0xc] sm:$0xf]
        %v603 = vld [vmem:[#allocation9 + $0x10] sm:$0xf]
        %v604 = vld [vmem:[#allocation9 + $0x14] sm:$0xf]
        %v605 = vld [vmem:[#allocation9 + $0x18] sm:$0xf]
        %v606 = vld [vmem:[#allocation9 + $0x1c] sm:$0xf]
        %v607 = vld [vmem:[#allocation9 + $0x20] sm:$0xf]
        %v608 = vld [vmem:[#allocation9 + $0x24] sm:$0xf]
        %v609 = vld [vmem:[#allocation9 + $0x28] sm:$0xf]
        %v610 = vld [vmem:[#allocation9 + $0x2c] sm:$0xf]
        %v611 = vld [vmem:[#allocation9 + $0x30] sm:$0xf]
        %v612 = vld [vmem:[#allocation9 + $0x34] sm:$0xf]
        %v613 = vld [vmem:[#allocation9 + $0x38] sm:$0xf]
        %v614 = vld [vmem:[#allocation9 + $0x3c] sm:$0xf]
        %v615 = vld [vmem:[#allocation9 + $0x40] sm:$0xf]
        %v616 = vld [vmem:[#allocation9 + $0x44] sm:$0xf]
        %v617 = vld [vmem:[#allocation9 + $0x48] sm:$0xf]
        %v618 = vld [vmem:[#allocation9 + $0x4c] sm:$0xf]
        %v619 = vld [vmem:[#allocation9 + $0x50] sm:$0xf]
        %v620 = vld [vmem:[#allocation9 + $0x54] sm:$0xf]
        %v621 = vld [vmem:[#allocation9 + $0x58] sm:$0xf]
        %v622 = vld [vmem:[#allocation9 + $0x5c] sm:$0xf]
        %v623 = vld [vmem:[#allocation9 + $0x60] sm:$0xf]
        %v624 = vld [vmem:[#allocation9 + $0x64] sm:$0xf]
        %v625 = vld [vmem:[#allocation9 + $0x68] sm:$0xf]
        %v626 = vld [vmem:[#allocation9 + $0x6c] sm:$0xf]
        %v627 = vld [vmem:[#allocation9 + $0x70] sm:$0xf]
        %v628 = vld [vmem:[#allocation9 + $0x74] sm:$0xf]
        %v629 = vld [vmem:[#allocation9 + $0x78] sm:$0xf]
        %v630 = vld [vmem:[#allocation9 + $0x7c] sm:$0xf]
        %v631 = vld [vmem:[#allocation10] sm:$0x1]
        %v633 = vlaneseq
        %v634 = vshrl.u32 %v633, 7
        %v635 = vsub.s32 0, %v634
        %v636 = vrot.slane %v631, %v635
        %v670 = vunpack.c.l.b16 %v599
        %v671 = vunpack.c.l.b16 %v600
        %v672 = vunpack.c.l.b16 %v601
        %v673 = vunpack.c.l.b16 %v602
        %v674 = vunpack.c.l.b16 %v603
        %v675 = vunpack.c.l.b16 %v604
        %v676 = vunpack.c.l.b16 %v605
        %v677 = vunpack.c.l.b16 %v606
        %v678 = vunpack.c.l.b16 %v607
        %v679 = vunpack.c.l.b16 %v608
        %v680 = vunpack.c.l.b16 %v609
        %v681 = vunpack.c.l.b16 %v610
        %v682 = vunpack.c.l.b16 %v611
        %v683 = vunpack.c.l.b16 %v612
        %v684 = vunpack.c.l.b16 %v613
        %v685 = vunpack.c.l.b16 %v614
        %v686 = vunpack.c.l.b16 %v615
        %v687 = vunpack.c.l.b16 %v616
        %v688 = vunpack.c.l.b16 %v617
        %v689 = vunpack.c.l.b16 %v618
        %v690 = vunpack.c.l.b16 %v619
        %v691 = vunpack.c.l.b16 %v620
        %v692 = vunpack.c.l.b16 %v621
        %v693 = vunpack.c.l.b16 %v622
        %v694 = vunpack.c.l.b16 %v623
        %v695 = vunpack.c.l.b16 %v624
        %v696 = vunpack.c.l.b16 %v625
        %v697 = vunpack.c.l.b16 %v626
        %v698 = vunpack.c.l.b16 %v627
        %v699 = vunpack.c.l.b16 %v628
        %v700 = vunpack.c.l.b16 %v629
        %v701 = vunpack.c.l.b16 %v630
        %v702 = vpack.c.b16 %v671, %v670
        %v703 = vpack.c.b16 %v673, %v672
        %v704 = vpack.c.b16 %v675, %v674
        %v705 = vpack.c.b16 %v677, %v676
        %v706 = vpack.c.b16 %v679, %v678
        %v707 = vpack.c.b16 %v681, %v680
        %v708 = vpack.c.b16 %v683, %v682
        %v709 = vpack.c.b16 %v685, %v684
        %v710 = vpack.c.b16 %v687, %v686
        %v711 = vpack.c.b16 %v689, %v688
        %v712 = vpack.c.b16 %v691, %v690
        %v713 = vpack.c.b16 %v693, %v692
        %v714 = vpack.c.b16 %v695, %v694
        %v715 = vpack.c.b16 %v697, %v696
        %v716 = vpack.c.b16 %v699, %v698
        %v717 = vpack.c.b16 %v701, %v700
        %734 = vmatprep.subr.bf16.mxu0 0
        %735 = vmatpush1.bf16.msra.mxu0 %v702
        %736 = vmatprep.subr.bf16.mxu0 0
        %737 = vmatpush1.bf16.msra.mxu0 %v703
        %738 = vmatprep.subr.bf16.mxu0 0
        %739 = vmatpush1.bf16.msra.mxu0 %v704
        %740 = vmatprep.subr.bf16.mxu0 0
        %741 = vmatpush1.bf16.msra.mxu0 %v705
        %742 = vmatprep.subr.bf16.mxu0 0
        %743 = vmatpush1.bf16.msra.mxu0 %v706
        %744 = vmatprep.subr.bf16.mxu0 0
        %745 = vmatpush1.bf16.msra.mxu0 %v707
        %746 = vmatprep.subr.bf16.mxu0 0
        %747 = vmatpush1.bf16.msra.mxu0 %v708
        %748 = vmatprep.subr.bf16.mxu0 0
        %749 = vmatpush1.bf16.msra.mxu0 %v709
        %750 = vmatprep.subr.bf16.mxu0 0
        %751 = vmatpush1.bf16.msra.mxu0 %v710
        %752 = vmatprep.subr.bf16.mxu0 0
        %753 = vmatpush1.bf16.msra.mxu0 %v711
        %754 = vmatprep.subr.bf16.mxu0 0
        %755 = vmatpush1.bf16.msra.mxu0 %v712
        %756 = vmatprep.subr.bf16.mxu0 0
        %757 = vmatpush1.bf16.msra.mxu0 %v713
        %758 = vmatprep.subr.bf16.mxu0 0
        %759 = vmatpush1.bf16.msra.mxu0 %v714
        %760 = vmatprep.subr.bf16.mxu0 0
        %761 = vmatpush1.bf16.msra.mxu0 %v715
        %762 = vmatprep.subr.bf16.mxu0 0
        %763 = vmatpush1.bf16.msra.mxu0 %v716
        %764 = vmatprep.subr.bf16.mxu0 0
        %765 = vmatpush1.bf16.msra.mxu0 %v717
        %766 = vmatprep.mubr.bf16.mxu0 %v592
        %767 = vmatmul.mubr.bf16.gmra.mrb[0].mxu0 %v591
        %v768 = vpop.f32.mrb[0].mxu0
        %v769 = vadd.f32 %v636, %v768
        %v770 = vpop.f32.mrb[0].mxu0
        %v771 = vpop.f32.mrb[0].mxu0
        %v772 = vadd.f32 %v636, %v771
        %v773 = vpop.f32.mrb[0].mxu0
        %774 = vmatprep.mubr.bf16.mxu0 %v594
        %775 = vmatmul.mubr.bf16.gmra.mrb[0].mxu0 %v593
        %v776 = vpop.f32.mrb[0].mxu0
        %v777 = vadd.f32 %v636, %v776
        %v778 = vpop.f32.mrb[0].mxu0
        %v779 = vpop.f32.mrb[0].mxu0
        %v780 = vadd.f32 %v636, %v779
        %v781 = vpop.f32.mrb[0].mxu0
        %782 = vmatprep.mubr.bf16.mxu0 %v596
        %783 = vmatmul.mubr.bf16.gmra.mrb[0].mxu0 %v595
        %v784 = vpop.f32.mrb[0].mxu0
        %v785 = vadd.f32 %v636, %v784
        %v786 = vpop.f32.mrb[0].mxu0
        %v787 = vpop.f32.mrb[0].mxu0
        %v788 = vadd.f32 %v636, %v787
        %v789 = vpop.f32.mrb[0].mxu0
        %790 = vmatprep.mubr.bf16.mxu0 %v598
        %791 = vmatmul.mubr.bf16.gmra.mrb[0].mxu0 %v597
        %v792 = vpop.f32.mrb[0].mxu0
        %v793 = vadd.f32 %v636, %v792
        %v794 = vpop.f32.mrb[0].mxu0
        %v795 = vpop.f32.mrb[0].mxu0
        %v796 = vadd.f32 %v636, %v795
        %v797 = vpop.f32.mrb[0].mxu0
        %798 = vdwg.mxu0
        %v799 = vmul.f32 %v769, %v769
        %v800 = vmul.f32 %v772, %v772
        %v801 = vmul.f32 %v777, %v777
        %v802 = vmul.f32 %v780, %v780
        %v803 = vmul.f32 %v785, %v785
        %v804 = vmul.f32 %v788, %v788
        %v805 = vmul.f32 %v793, %v793
        %v806 = vmul.f32 %v796, %v796
        %v807 = vmul.f32 %v769, %v799
        %v808 = vmul.f32 %v772, %v800
        %v809 = vmul.f32 %v777, %v801
        %v810 = vmul.f32 %v780, %v802
        %v811 = vmul.f32 %v785, %v803
        %v812 = vmul.f32 %v788, %v804
        %v813 = vmul.f32 %v793, %v805
        %v814 = vmul.f32 %v796, %v806
        %v815 = vmul.f32 %v807, 0.044715
        %v816 = vmul.f32 %v808, 0.044715
        %v817 = vmul.f32 %v809, 0.044715
        %v818 = vmul.f32 %v810, 0.044715
        %v819 = vmul.f32 %v811, 0.044715
        %v820 = vmul.f32 %v812, 0.044715
        %v821 = vmul.f32 %v813, 0.044715
        %v822 = vmul.f32 %v814, 0.044715
        %v823 = vadd.f32 %v769, %v815
        %v824 = vadd.f32 %v772, %v816
        %v825 = vadd.f32 %v777, %v817
        %v826 = vadd.f32 %v780, %v818
        %v827 = vadd.f32 %v785, %v819
        %v828 = vadd.f32 %v788, %v820
        %v829 = vadd.f32 %v793, %v821
        %v830 = vadd.f32 %v796, %v822
        %v831 = vmul.f32 %v823, 0.7978846
        %v832 = vmul.f32 %v824, 0.7978846
        %v833 = vmul.f32 %v825, 0.7978846
        %v834 = vmul.f32 %v826, 0.7978846
        %v835 = vmul.f32 %v827, 0.7978846
        %v836 = vmul.f32 %v828, 0.7978846
        %v837 = vmul.f32 %v829, 0.7978846
        %v838 = vmul.f32 %v830, 0.7978846
        %v839 = vtanh.pop %v831
        %v840 = vtanh.pop %v832
        %v841 = vtanh.pop %v833
        %v842 = vtanh.pop %v834
        %v843 = vtanh.pop %v835
        %v844 = vtanh.pop %v836
        %v845 = vtanh.pop %v837
        %v846 = vtanh.pop %v838
        %v847 = vadd.f32 %v839, 1.0
        %v848 = vadd.f32 %v840, 1.0
        %v849 = vadd.f32 %v841, 1.0
        %v850 = vadd.f32 %v842, 1.0
        %v851 = vadd.f32 %v843, 1.0
        %v852 = vadd.f32 %v844, 1.0
        %v853 = vadd.f32 %v845, 1.0
        %v854 = vadd.f32 %v846, 1.0
        %v855 = vmul.f32 %v847, 0.5
        %v856 = vmul.f32 %v848, 0.5
        %v857 = vmul.f32 %v849, 0.5
        %v858 = vmul.f32 %v850, 0.5
        %v859 = vmul.f32 %v851, 0.5
        %v860 = vmul.f32 %v852, 0.5
        %v861 = vmul.f32 %v853, 0.5
        %v862 = vmul.f32 %v854, 0.5
        %v863 = vmul.f32 %v769, %v855
        %v864 = vmul.f32 %v772, %v856
        %v865 = vmul.f32 %v777, %v857
        %v866 = vmul.f32 %v780, %v858
        %v867 = vmul.f32 %v785, %v859
        %v868 = vmul.f32 %v788, %v860
        %v869 = vmul.f32 %v793, %v861
        %v870 = vmul.f32 %v796, %v862
        %v871 = vld [vmem:[#allocation3] sm:$0xff]
        %v872 = vld [vmem:[#allocation3 + $0x8] sm:$0xff]
        %v873 = vld [vmem:[#allocation3 + $0x10] sm:$0xff]
        %v874 = vld [vmem:[#allocation3 + $0x18] sm:$0xff]
        %v875 = vld [vmem:[#allocation3 + $0x20] sm:$0xff]
        %v876 = vld [vmem:[#allocation3 + $0x28] sm:$0xff]
        %v877 = vld [vmem:[#allocation3 + $0x30] sm:$0xff]
        %v878 = vld [vmem:[#allocation3 + $0x38] sm:$0xff]
        %v879 = vpack.c.bf16 %v864, %v863
        %v880 = vpack.c.bf16 %v866, %v865
        %v881 = vpack.c.bf16 %v868, %v867
        %v882 = vpack.c.bf16 %v870, %v869
        %v883 = vld [vmem:[#allocation12] sm:$0xf]
        %v884 = vld [vmem:[#allocation12 + $0x4] sm:$0xf]
        %v885 = vld [vmem:[#allocation12 + $0x8] sm:$0xf]
        %v886 = vld [vmem:[#allocation12 + $0xc] sm:$0xf]
        %v887 = vld [vmem:[#allocation12 + $0x10] sm:$0xf]
        %v888 = vld [vmem:[#allocation12 + $0x14] sm:$0xf]
        %v889 = vld [vmem:[#allocation12 + $0x18] sm:$0xf]
        %v890 = vld [vmem:[#allocation12 + $0x1c] sm:$0xf]
        %v891 = vld [vmem:[#allocation12 + $0x20] sm:$0xf]
        %v892 = vld [vmem:[#allocation12 + $0x24] sm:$0xf]
        %v893 = vld [vmem:[#allocation12 + $0x28] sm:$0xf]
        %v894 = vld [vmem:[#allocation12 + $0x2c] sm:$0xf]
        %v895 = vld [vmem:[#allocation12 + $0x30] sm:$0xf]
        %v896 = vld [vmem:[#allocation12 + $0x34] sm:$0xf]
        %v897 = vld [vmem:[#allocation12 + $0x38] sm:$0xf]
        %v898 = vld [vmem:[#allocation12 + $0x3c] sm:$0xf]
        %v915 = vunpack.c.l.b16 %v883
        %v916 = vunpack.c.l.b16 %v884
        %v917 = vunpack.c.l.b16 %v885
        %v918 = vunpack.c.l.b16 %v886
        %v919 = vunpack.c.l.b16 %v887
        %v920 = vunpack.c.l.b16 %v888
        %v921 = vunpack.c.l.b16 %v889
        %v922 = vunpack.c.l.b16 %v890
        %v923 = vunpack.c.l.b16 %v891
        %v924 = vunpack.c.l.b16 %v892
        %v925 = vunpack.c.l.b16 %v893
        %v926 = vunpack.c.l.b16 %v894
        %v927 = vunpack.c.l.b16 %v895
        %v928 = vunpack.c.l.b16 %v896
        %v929 = vunpack.c.l.b16 %v897
        %v930 = vunpack.c.l.b16 %v898
        %v931 = vpack.c.b16 %v916, %v915
        %v932 = vpack.c.b16 %v918, %v917
        %v933 = vpack.c.b16 %v920, %v919
        %v934 = vpack.c.b16 %v922, %v921
        %v935 = vpack.c.b16 %v924, %v923
        %v936 = vpack.c.b16 %v926, %v925
        %v937 = vpack.c.b16 %v928, %v927
        %v938 = vpack.c.b16 %v930, %v929
        %947 = vmatprep.subr.bf16.mxu0 0
        %948 = vmatpush1.bf16.msra.mxu0 %v931
        %949 = vmatprep.subr.bf16.mxu0 0
        %950 = vmatpush1.bf16.msra.mxu0 %v932
        %951 = vmatprep.subr.bf16.mxu0 0
        %952 = vmatpush1.bf16.msra.mxu0 %v933
        %953 = vmatprep.subr.bf16.mxu0 0
        %954 = vmatpush1.bf16.msra.mxu0 %v934
        %955 = vmatprep.subr.bf16.mxu0 0
        %956 = vmatpush1.bf16.msra.mxu0 %v935
        %957 = vmatprep.subr.bf16.mxu0 0
        %958 = vmatpush1.bf16.msra.mxu0 %v936
        %959 = vmatprep.subr.bf16.mxu0 0
        %960 = vmatpush1.bf16.msra.mxu0 %v937
        %961 = vmatprep.subr.bf16.mxu0 0
        %962 = vmatpush1.bf16.msra.mxu0 %v938
        %963 = vmatprep.subr.bf16.mxu0 0
        %964 = vmatpush1.bf16.msra.mxu0 0
        %965 = vmatprep.subr.bf16.mxu0 0
        %966 = vmatpush1.bf16.msra.mxu0 0
        %967 = vmatprep.subr.bf16.mxu0 0
        %968 = vmatpush1.bf16.msra.mxu0 0
        %969 = vmatprep.subr.bf16.mxu0 0
        %970 = vmatpush1.bf16.msra.mxu0 0
        %971 = vmatprep.subr.bf16.mxu0 0
        %972 = vmatpush1.bf16.msra.mxu0 0
        %973 = vmatprep.subr.bf16.mxu0 0
        %974 = vmatpush1.bf16.msra.mxu0 0
        %975 = vmatprep.subr.bf16.mxu0 0
        %976 = vmatpush1.bf16.msra.mxu0 0
        %977 = vmatprep.subr.bf16.mxu0 0
        %978 = vmatpush1.bf16.msra.mxu0 0
        %979 = vmatprep.mubr.bf16.mxu0 0
        %980 = vmatmul.mubr.bf16.gmra.mrb[0].mxu0 %v879
        %v981 = vpop.f32.mrb[0].mxu0
        %v982 = vadd.f32 0.0, %v981
        %v983 = vpop.f32.mrb[0].mxu0
        %v984 = vpop.f32.mrb[0].mxu0
        %v985 = vadd.f32 0.0, %v984
        %v986 = vpop.f32.mrb[0].mxu0
        %987 = vmatprep.mubr.bf16.mxu0 0
        %988 = vmatmul.mubr.bf16.gmra.mrb[0].mxu0 %v880
        %v989 = vpop.f32.mrb[0].mxu0
        %v990 = vadd.f32 0.0, %v989
        %v991 = vpop.f32.mrb[0].mxu0
        %v992 = vpop.f32.mrb[0].mxu0
        %v993 = vadd.f32 0.0, %v992
        %v994 = vpop.f32.mrb[0].mxu0
        %995 = vmatprep.mubr.bf16.mxu0 0
        %996 = vmatmul.mubr.bf16.gmra.mrb[0].mxu0 %v881
        %v997 = vpop.f32.mrb[0].mxu0
        %v998 = vadd.f32 0.0, %v997
        %v999 = vpop.f32.mrb[0].mxu0
        %v1000 = vpop.f32.mrb[0].mxu0
        %v1001 = vadd.f32 0.0, %v1000
        %v1002 = vpop.f32.mrb[0].mxu0
        %1003 = vmatprep.mubr.bf16.mxu0 0
        %1004 = vmatmul.mubr.bf16.gmra.mrb[0].mxu0 %v882
        %v1005 = vpop.f32.mrb[0].mxu0
        %v1006 = vadd.f32 0.0, %v1005
        %v1007 = vpop.f32.mrb[0].mxu0
        %v1008 = vpop.f32.mrb[0].mxu0
        %v1009 = vadd.f32 0.0, %v1008
        %v1010 = vpop.f32.mrb[0].mxu0
        %1011 = vdwg.mxu0
        %v1012 = vadd.f32 %v871, %v982
        %v1013 = vadd.f32 %v872, %v985
        %v1014 = vadd.f32 %v873, %v990
        %v1015 = vadd.f32 %v874, %v993
        %v1016 = vadd.f32 %v875, %v998
        %v1017 = vadd.f32 %v876, %v1001
        %v1018 = vadd.f32 %v877, %v1006
        %v1019 = vadd.f32 %v878, %v1009
        %1020 = vst [vmem:[#allocation3] sm:$0xff] %v1012
        %1021 = vst [vmem:[#allocation3 + $0x8] sm:$0xff] %v1013
        %1022 = vst [vmem:[#allocation3 + $0x10] sm:$0xff] %v1014
        %1023 = vst [vmem:[#allocation3 + $0x18] sm:$0xff] %v1015
        %1024 = vst [vmem:[#allocation3 + $0x20] sm:$0xff] %v1016
        %1025 = vst [vmem:[#allocation3 + $0x28] sm:$0xff] %v1017
        %1026 = vst [vmem:[#allocation3 + $0x30] sm:$0xff] %v1018
        %1027 = vst [vmem:[#allocation3 + $0x38] sm:$0xff] %v1019
        // Predicated region
        $region73: #{tpu_custom_call.1} parent=43 // pred_check
          %p1028 = pneg %p402
        $region74: #{tpu_custom_call.1} parent=43 // pred_check_branch
          %1030 = sbr.rel (%p1028) target = $region76
        $region75: #{tpu_custom_call.1} parent=43 // pred_region
          %v1031 = vld [vmem:[#allocation3] sm:$0xff]
          %v1032 = vld [vmem:[#allocation3 + $0x8] sm:$0xff]
          %v1033 = vld [vmem:[#allocation3 + $0x10] sm:$0xff]
          %v1034 = vld [vmem:[#allocation3 + $0x18] sm:$0xff]
          %v1035 = vld [vmem:[#allocation3 + $0x20] sm:$0xff]
          %v1036 = vld [vmem:[#allocation3 + $0x28] sm:$0xff]
          %v1037 = vld [vmem:[#allocation3 + $0x30] sm:$0xff]
          %v1038 = vld [vmem:[#allocation3 + $0x38] sm:$0xff]
          %v1039 = vld [vmem:[#allocation13] sm:$0x1]
          %v1041 = vlaneseq
          %v1042 = vshrl.u32 %v1041, 7
          %v1043 = vsub.s32 0, %v1042
          %v1044 = vrot.slane %v1039, %v1043
          %v1046 = vadd.f32 %v1031, %v1044
          %v1047 = vadd.f32 %v1032, %v1044
          %v1048 = vadd.f32 %v1033, %v1044
          %v1049 = vadd.f32 %v1034, %v1044
          %v1050 = vadd.f32 %v1035, %v1044
          %v1051 = vadd.f32 %v1036, %v1044
          %v1052 = vadd.f32 %v1037, %v1044
          %v1053 = vadd.f32 %v1038, %v1044
          %v1054 = vpack.c.bf16 %v1047, %v1046
          %v1055 = vpack.c.bf16 %v1049, %v1048
          %v1056 = vpack.c.bf16 %v1051, %v1050
          %v1057 = vpack.c.bf16 %v1053, %v1052
          %v1062 = vunpack.c.l.b16 %v1054
          %v1063 = vunpack.c.h.b16 %v1054
          %v1064 = vunpack.c.l.b16 %v1055
          %v1065 = vunpack.c.h.b16 %v1055
          %v1066 = vunpack.c.l.b16 %v1056
          %v1067 = vunpack.c.h.b16 %v1056
          %v1068 = vunpack.c.l.b16 %v1057
          %v1069 = vunpack.c.h.b16 %v1057
          %v1070 = vpack.c.b16 %v1062, %v1062
          %v1071 = vpack.c.b16 %v1063, %v1063
          %v1072 = vpack.c.b16 %v1064, %v1064
          %v1073 = vpack.c.b16 %v1065, %v1065
          %v1074 = vpack.c.b16 %v1066, %v1066
          %v1075 = vpack.c.b16 %v1067, %v1067
          %v1076 = vpack.c.b16 %v1068, %v1068
          %v1077 = vpack.c.b16 %v1069, %v1069
          %1086 = vst [vmem:[%s398] sm:$0xf] %v1070
          %1087 = vst [vmem:[%s398 + $0x4] sm:$0xf] %v1071
          %1088 = vst [vmem:[%s398 + $0x8] sm:$0xf] %v1072
          %1089 = vst [vmem:[%s398 + $0xc] sm:$0xf] %v1073
          %1090 = vst [vmem:[%s398 + $0x10] sm:$0xf] %v1074
          %1091 = vst [vmem:[%s398 + $0x14] sm:$0xf] %v1075
          %1092 = vst [vmem:[%s398 + $0x18] sm:$0xf] %v1076
          %1093 = vst [vmem:[%s398 + $0x1c] sm:$0xf] %v1077
        $region76: #{tpu_custom_call.1} parent=43 // pred_fallthru
          _
        %s1094 = sand.u32 %s199, 1
        %s1095 = scalar_lea.sflag [#allocation6], %s1094
        %s1096 = sand.u32 %s199, 1
        %s1097 = smul.addr %s1096, 32
        %s1098 = scalar_lea.vmem [#allocation15], %s1097
        // Predicated region
        $region77: #{tpu_custom_call.1} parent=43 // pred_check
          %p1099 = pneg %p209
        $region78: #{tpu_custom_call.1} parent=43 // pred_check_branch
          %1101 = sbr.rel (%p1099) target = $region80
        $region79: #{tpu_custom_call.1} parent=43 // pred_region
          %s1102 = smul.u32 8, %s32
          %s1104 = ssub.s32 512, 512
          %1105 = vsyncadd %s1095, %s1104
          %s1106 = smul.addr %s1102, 64
          %s1107 = scalar_lea.hbm %s6, %s1106
          %s1108 = sshll.u32 %s1098, 4
          %s1109 = int_to_ptr.vmem [resolvable:$true] %s1108
          %1114 = dma.vmem_to_hbm [thread:$0]  %s1109, 512, %s1107, %s1095, 64, 64, 4
        $region80: #{tpu_custom_call.1} parent=43 // pred_fallthru
          _
      $region44: #{tpu_custom_call.1} parent=5 // pred_fallthru
        _
      %p1115 = scmp.le.s32.totalorder 2, %s23
      // Predicated region
      $region81: #{tpu_custom_call.1} parent=5 // pred_check
        %p1116 = pneg %p1115
      $region82: #{tpu_custom_call.1} parent=5 // pred_check_branch
        %1118 = sbr.rel (%p1116) target = $region84
      $region83: #{tpu_custom_call.1} parent=5 // pred_region
        %s1119 = ssub.s32 %s23, 2
        // Predicated region
        $region85: #{tpu_custom_call.1} parent=83 // pred_check
          %p1120 = pneg %p215
        $region86: #{tpu_custom_call.1} parent=83 // pred_check_branch
          %1122 = sbr.rel (%p1120) target = $region88
        $region87: #{tpu_custom_call.1} parent=83 // pred_region
          %s1123 = sand.u32 %s200, 1
          %s1124 = scalar_lea.sflag [#allocation6], %s1123
          %s1125 = sand.u32 %s200, 1
          %s1126 = smul.addr %s1125, 32
          %s1127 = scalar_lea.vmem [#allocation15], %s1126
          %1128 = dma.done %s1124, 512
        $region88: #{tpu_custom_call.1} parent=83 // pred_fallthru
          _
      $region84: #{tpu_custom_call.1} parent=5 // pred_fallthru
        _
    $region6: #{tpu_custom_call.1} parent=1 // loop_footer
      %s27 = sadd.s32 1, %s23
    $region7: #{tpu_custom_call.1} parent=1 // loop_footer_branch
      %22 = sbr.rel target = $region3
    $region8: #{tpu_custom_call.1} parent=1 // loop_exit
      _
    %1129 = vsyncpa [#allocation5], 1
    %s1130 = scalar_lea.sflag [#allocation5], 1
    %1131 = vsyncpa %s1130, 1
    %1132 = vsyncpa [#allocation8], 1
    %s1133 = scalar_lea.sflag [#allocation8], 1
    %1134 = vsyncpa %s1133, 1
    %1135 = vsyncpa [#allocation11], 1
    %1136 = vsyncpa [#allocation14], 1
    %1137 = vsyncpa [#allocation6], 1
    %s1138 = scalar_lea.sflag [#allocation6], 1
    %1139 = vsyncpa %s1138, 1

</llo_original>
